<compile_context>
chip_gen: v5e
topology: v5e:2x2
jax: 0.10.0
libtpu: 0.0.40
codegen_flags: <defaults>
</compile_context>

<pallas_src>
import functools

import jax
import jax.numpy as jnp
from jax.experimental import pallas as pl
from jax.experimental.pallas import tpu as pltpu

LANE = 128               # padded feature width of the hidden layers
CONST_LANE = LANE - 1    # otherwise-unused lane carrying a constant 1.0 (>=20, no aliasing)
TM_CAP = 4096            # batch-tile cap (multiple of 8); ~10 MiB of f32 intermediates


def _round_up(n, m):
    return ((n + m - 1) // m) * m


def _pad_to(a, rows, cols):
    out = jnp.zeros((rows, cols), dtype=jnp.float32)
    return out.at[: a.shape[0], : a.shape[1]].set(a.astype(jnp.float32))


@functools.lru_cache(maxsize=1)
def _num_tensorcores():
    # 2 TensorCores per chip on v7x, 1 on v5e/v6e.  Detection failure is benign:
    # falling back to 1 just means a single big tile (the right answer off-v7x).
    try:
        kind = jax.devices()[0].device_kind.lower()
    except Exception:
        return 1
    return 2 if "v7" in kind else 1


def _choose_tm(n):
    """Largest batch tile (multiple of 8) up to TM_CAP; >=2 grid steps only on v7x."""
    n8 = _round_up(max(n, 1), 8)
    ntc = _num_tensorcores()
    if ntc > 1:
        tm = _round_up(pl.cdiv(n8, ntc), 8)   # one tile per TensorCore when possible
    else:
        tm = n8                               # single TC: a 1-step grid is cheapest
    return max(8, min(TM_CAP, tm))


def _mlp_kernel(x_ref, w1_ref, b1_ref, w2_ref, w3_ref, o_ref, *, k):
    """Fused Linear->ReLU->Linear->ReLU->Linear on one (TM, 2) batch tile.

    Layer 1 (in_features = 2) is a 2-term outer product on the VPU in f32.
    Its padded lane CONST_LANE carries a constant 1.0 (set via b1 and
    propagated by w2), so the b2/b3 bias adds ride for free inside the
    already-128-padded MXU matmuls instead of costing VPU passes.
    """
    x = x_ref[...]                                            # (TM, 2) f32
    h1 = jnp.maximum(
        x[:, 0:1] * w1_ref[0:1, :] + x[:, 1:2] * w1_ref[1:2, :] + b1_ref[...],
        0.0)                                                  # (TM, 128) f32, lane 127 == 1

    # Layer 2: bf16 MXU matmul, f32 accumulate; b2 folded into row CONST_LANE of w2.
    h2 = jnp.maximum(
        jnp.dot(h1.astype(jnp.bfloat16), w2_ref[...],
                preferred_element_type=jnp.float32),
        0.0)                                                  # (TM, 128) f32, lane 127 == 1

    # Layer 3: bf16 MXU matmul, f32 accumulate; b3 folded into row CONST_LANE of w3.
    y = jnp.dot(h2.astype(jnp.bfloat16), w3_ref[...],
                preferred_element_type=jnp.float32)           # (TM, 128) f32

    # Write only the k real output columns (128/k fewer HBM writeback bytes,
    # no trailing XLA slice pass).
    o_ref[...] = y[:, :k].astype(o_ref.dtype)


def prepare_params(params):
    """One-time padding, bf16 cast, and bias folding (hoisted out of the forward)."""
    w1, b1, w2, b2, w3, b3 = params
    assert w3.shape[1] <= LANE, "k must be <= 128 for this toy kernel"

    w1_p = _pad_to(w1, 2, LANE)                               # (2, 128) f32 (VPU path)
    b1_p = _pad_to(b1[None, :], 1, LANE)                      # (1, 128) f32
    b1_p = b1_p.at[0, CONST_LANE].set(1.0)                    # constant-1 lane (survives ReLU)

    w2_p = _pad_to(w2, LANE, LANE)                            # (128, 128)
    w2_p = w2_p.at[CONST_LANE, : w2.shape[1]].set(b2.astype(jnp.float32))  # fold b2
    w2_p = w2_p.at[CONST_LANE, CONST_LANE].set(1.0)           # propagate constant-1 lane
    w2_p = w2_p.astype(jnp.bfloat16)

    w3_p = _pad_to(w3, LANE, LANE)                            # (128, 128)
    w3_p = w3_p.at[CONST_LANE, : w3.shape[1]].set(b3.astype(jnp.float32))  # fold b3
    w3_p = w3_p.astype(jnp.bfloat16)

    return (w1_p, b1_p, w2_p, w3_p)


@functools.partial(jax.jit, static_argnames=("k",))
def net_forward(x, padded_params, *, k):
    """Forward pass of Net.  x: (N, 2) float32 -> (N, k) float32."""
    w1_p, b1_p, w2_p, w3_p = padded_params
    n = x.shape[0]
    tm = _choose_tm(n)
    grid = (pl.cdiv(n, tm),)     # ragged edge handled by Pallas block masking

    return pl.pallas_call(
        functools.partial(_mlp_kernel, k=k),
        out_shape=jax.ShapeDtypeStruct((n, k), jnp.float32),
        grid_spec=pltpu.PrefetchScalarGridSpec(
            num_scalar_prefetch=0,
            grid=grid,
            in_specs=[
                pl.BlockSpec((tm, 2), lambda i: (i, 0)),        # x (unpadded, 2 lanes)
                pl.BlockSpec((2, LANE), lambda i: (0, 0)),      # w1 (f32, VPU)
                pl.BlockSpec((1, LANE), lambda i: (0, 0)),      # b1 (+ constant-1 lane)
                pl.BlockSpec((LANE, LANE), lambda i: (0, 0)),   # w2 (bf16, b2 folded)
                pl.BlockSpec((LANE, LANE), lambda i: (0, 0)),   # w3 (bf16, b3 folded)
            ],
            out_specs=pl.BlockSpec((tm, k), lambda i: (i, 0)),
        ),
        compiler_params=pltpu.CompilerParams(
            dimension_semantics=("parallel",),
            vmem_limit_bytes=32 << 20,   # v5e scoped default is only 16 MiB
        ),
    )(x, w1_p, b1_p, w2_p, w3_p)


def init_params(key, k):
    """Deterministic init matching nn.Linear shapes: W^T stored as (in, out)."""
    dims = [(2, 10), (10, 20), (20, k)]
    params = []
    for fan_in, fan_out in dims:
        key, kw, kb = jax.random.split(key, 3)
        bound = 1.0 / jnp.sqrt(jnp.float32(fan_in))
        w = jax.random.uniform(kw, (fan_in, fan_out), jnp.float32, -bound, bound)
        b = jax.random.uniform(kb, (fan_out,), jnp.float32, -bound, bound)
        params.extend([w, b])
    return tuple(params)


if __name__ == "__main__":
    k = 5
    key = jax.random.PRNGKey(0)
    key, kp = jax.random.split(key)
    params = init_params(kp, k)
    padded_params = prepare_params(params)   # done once, outside the forward path

    w1, b1, w2, b2, w3, b3 = params

    # Deliberately ragged batch sizes: exercise the single-tile path and (on
    # v7x) the 2-tile megacore path, both with a masked edge block.
    for N in (37, 1037):
        key, kx = jax.random.split(key)
        x = jax.random.normal(kx, (N, 2), dtype=jnp.float32)

        out = net_forward(x, padded_params, k=k)
        jax.block_until_ready(out)

        # Reference check in plain f32 JAX (same math as the PyTorch module).
        h1 = jnp.maximum(x @ w1 + b1, 0.0)
        h2 = jnp.maximum(h1 @ w2 + b2, 0.0)
        ref = h2 @ w3 + b3

        assert out.shape == (N, k)
        # bf16 matmul operands (f32 accumulate) -> small drift vs f32 reference.
        err = float(jnp.max(jnp.abs(out - ref)))
        assert jnp.allclose(out, ref, atol=5e-2, rtol=5e-2), f"N={N}: max abs err {err}"

    print("KERNEL_OK")
</pallas_src>

<mosaic_0001>
module attributes {stable_mosaic.version = 11 : i64} {
  func.func @_mlp_kernel(%arg0: i32, %arg1: memref<40x2xf32, #tpu.memory_space<vmem>>, %arg2: memref<2x128xf32, #tpu.memory_space<vmem>>, %arg3: memref<1x128xf32, #tpu.memory_space<vmem>>, %arg4: memref<128x128xbf16, #tpu.memory_space<vmem>>, %arg5: memref<128x128xbf16, #tpu.memory_space<vmem>>, %arg6: memref<40x5xf32, #tpu.memory_space<vmem>>) attributes {dimension_semantics = [#tpu.dimension_semantics<parallel>], iteration_bounds = array<i64: 1>, scalar_prefetch = 0 : i64, scratch_operands = 0 : i64, tpu.core_type = #tpu.core_type<tc>, window_params = [{transform_indices = @transform_0, window_bounds = array<i64: 40, 2>}, {pipeline_mode = #tpu.pipeline_mode<synchronous>, transform_indices = @transform_1, window_bounds = array<i64: 2, 128>}, {pipeline_mode = #tpu.pipeline_mode<synchronous>, transform_indices = @transform_2, window_bounds = array<i64: 1, 128>}, {pipeline_mode = #tpu.pipeline_mode<synchronous>, transform_indices = @transform_3, window_bounds = array<i64: 128, 128>}, {pipeline_mode = #tpu.pipeline_mode<synchronous>, transform_indices = @transform_4, window_bounds = array<i64: 128, 128>}, {transform_indices = @transform_5, window_bounds = array<i64: 40, 5>}]} {
    %c0 = arith.constant 0 : index
    %c0_0 = arith.constant 0 : index
    %0 = vector.load %arg1[%c0, %c0_0] : memref<40x2xf32, #tpu.memory_space<vmem>>, vector<40x2xf32>
    %1 = vector.extract_strided_slice %0 {offsets = [0, 0], sizes = [40, 1], strides = [1, 1]} : vector<40x2xf32> to vector<40x1xf32>
    %c0_1 = arith.constant 0 : index
    %c0_2 = arith.constant 0 : index
    %2 = vector.load %arg2[%c0_1, %c0_2] : memref<2x128xf32, #tpu.memory_space<vmem>>, vector<1x128xf32>
    %3 = vector.broadcast %1 : vector<40x1xf32> to vector<40x128xf32>
    %4 = vector.broadcast %2 : vector<1x128xf32> to vector<40x128xf32>
    %5 = arith.mulf %3, %4 : vector<40x128xf32>
    %6 = vector.extract_strided_slice %0 {offsets = [0, 1], sizes = [40, 1], strides = [1, 1]} : vector<40x2xf32> to vector<40x1xf32>
    %c1 = arith.constant 1 : index
    %c0_3 = arith.constant 0 : index
    %7 = vector.load %arg2[%c1, %c0_3] : memref<2x128xf32, #tpu.memory_space<vmem>>, vector<1x128xf32>
    %8 = vector.broadcast %6 : vector<40x1xf32> to vector<40x128xf32>
    %9 = vector.broadcast %7 : vector<1x128xf32> to vector<40x128xf32>
    %10 = arith.mulf %8, %9 : vector<40x128xf32>
    %11 = arith.addf %5, %10 : vector<40x128xf32>
    %c0_4 = arith.constant 0 : index
    %c0_5 = arith.constant 0 : index
    %12 = vector.load %arg3[%c0_4, %c0_5] : memref<1x128xf32, #tpu.memory_space<vmem>>, vector<1x128xf32>
    %13 = vector.broadcast %12 : vector<1x128xf32> to vector<40x128xf32>
    %14 = arith.addf %11, %13 : vector<40x128xf32>
    %cst = arith.constant 0.000000e+00 : f32
    %15 = vector.broadcast %cst : f32 to vector<40x128xf32>
    %16 = arith.maximumf %14, %15 : vector<40x128xf32>
    %17 = arith.truncf %16 : vector<40x128xf32> to vector<40x128xbf16>
    %c0_6 = arith.constant 0 : index
    %c0_7 = arith.constant 0 : index
    %18 = vector.load %arg4[%c0_6, %c0_7] : memref<128x128xbf16, #tpu.memory_space<vmem>>, vector<128x128xbf16>
    %cst_8 = arith.constant dense<0.000000e+00> : vector<40x128xf32>
    %19 = tpu.matmul %17, %18, %cst_8 {dimension_numbers = #tpu.dot_dimension_numbers<[1], [0], [0], [1], [0, 0, 1, 1], [], []>} : vector<40x128xbf16>, vector<128x128xbf16>, vector<40x128xf32> -> vector<40x128xf32>
    %cst_9 = arith.constant 0.000000e+00 : f32
    %20 = vector.broadcast %cst_9 : f32 to vector<40x128xf32>
    %21 = arith.maximumf %19, %20 : vector<40x128xf32>
    %22 = arith.truncf %21 : vector<40x128xf32> to vector<40x128xbf16>
    %c0_10 = arith.constant 0 : index
    %c0_11 = arith.constant 0 : index
    %23 = vector.load %arg5[%c0_10, %c0_11] : memref<128x128xbf16, #tpu.memory_space<vmem>>, vector<128x128xbf16>
    %cst_12 = arith.constant dense<0.000000e+00> : vector<40x128xf32>
    %24 = tpu.matmul %22, %23, %cst_12 {dimension_numbers = #tpu.dot_dimension_numbers<[1], [0], [0], [1], [0, 0, 1, 1], [], []>} : vector<40x128xbf16>, vector<128x128xbf16>, vector<40x128xf32> -> vector<40x128xf32>
    %25 = vector.extract_strided_slice %24 {offsets = [0, 0], sizes = [40, 5], strides = [1, 1]} : vector<40x128xf32> to vector<40x5xf32>
    %c0_13 = arith.constant 0 : index
    %c0_14 = arith.constant 0 : index
    %26 = vector.load %arg6[%c0_13, %c0_14] : memref<40x5xf32, #tpu.memory_space<vmem>>, vector<40x5xf32>
    tpu.vector_store %arg6[%c0_13, %c0_14], %25 {strides = array<i32>} : memref<40x5xf32, #tpu.memory_space<vmem>>, vector<40x5xf32>,
    return
  }
  func.func @transform_0(%arg0: i32) -> (i32, i32) {
    %c0_i32 = arith.constant 0 : i32
    %c0_i32_0 = arith.constant 0 : i32
    return %arg0, %c0_i32 : i32, i32
  }
  func.func @transform_1(%arg0: i32) -> (i32, i32) {
    %c0_i32 = arith.constant 0 : i32
    %c0_i32_0 = arith.constant 0 : i32
    %c0_i32_1 = arith.constant 0 : i32
    return %c0_i32, %c0_i32_0 : i32, i32
  }
  func.func @transform_2(%arg0: i32) -> (i32, i32) {
    %c0_i32 = arith.constant 0 : i32
    %c0_i32_0 = arith.constant 0 : i32
    %c0_i32_1 = arith.constant 0 : i32
    return %c0_i32, %c0_i32_0 : i32, i32
  }
  func.func @transform_3(%arg0: i32) -> (i32, i32) {
    %c0_i32 = arith.constant 0 : i32
    %c0_i32_0 = arith.constant 0 : i32
    %c0_i32_1 = arith.constant 0 : i32
    return %c0_i32, %c0_i32_0 : i32, i32
  }
  func.func @transform_4(%arg0: i32) -> (i32, i32) {
    %c0_i32 = arith.constant 0 : i32
    %c0_i32_0 = arith.constant 0 : i32
    %c0_i32_1 = arith.constant 0 : i32
    return %c0_i32, %c0_i32_0 : i32, i32
  }
  func.func @transform_5(%arg0: i32) -> (i32, i32) {
    %c0_i32 = arith.constant 0 : i32
    %c0_i32_0 = arith.constant 0 : i32
    return %arg0, %c0_i32 : i32, i32
  }
}

</mosaic_0001>

<llo_original>
// kernel: net_forward.1
$region0: #{net_forward.1}
  #allocation0 [shape = 'u32[]', space=smem, size = 0x4, offset = 0x4, fixed_abs, tag = 'smem constant byte address 0x4 - core index']
  #allocation1 [shape = 'u32[72,128]{1,0:T(1,128)}', space=vmem, size = 0x9000, scoped, tag = 'internal scratch']
  %s0 = inlined_call_operand.vmem [shape: f32[37,2], index: 0, kind: input, shape index: {}]
  %s1 = inlined_call_operand.vmem [shape: f32[2,128], index: 1, kind: input, shape index: {}]
  %s2 = inlined_call_operand.vmem [shape: f32[1,128], index: 2, kind: input, shape index: {}]
  %s3 = inlined_call_operand.hbm [shape: bf16[128,128], index: 3, kind: input, shape index: {}]
  %s4 = inlined_call_operand.hbm [shape: bf16[128,128], index: 4, kind: input, shape index: {}]
  %s5 = inlined_call_operand.vmem [shape: f32[37,5], index: 5, kind: output, shape index: {}]
  %s6 = sld [smem:[#allocation0]]
  $region38: #{net_forward.1} parent=0
    _
  %s8 = ssub.s32 1, %s6
  %s9 = scalar_select 0, %s8, %s6
  $region1: #{net_forward.1} parent=0
    #allocation2 [shape = 'u8[32768]{0}', space=vmem, size = 0x8000, scoped, tag = 'input window, operand 3, single buffered']
    #allocation3 [shape = 's32[1]{0}', space=sflag, size = 0x4, scoped, tag = 'scoped memory for net_forward.1']
    #allocation4 [shape = 'u8[32768]{0}', space=vmem, size = 0x8000, scoped, tag = 'input window, operand 4, single buffered']
    #allocation5 [shape = 's32[1]{0}', space=sflag, size = 0x4, scoped, tag = 'scoped memory for net_forward.1']
    %10 = vsyncpa [#allocation3], 0
    %11 = vsyncpa [#allocation5], 0
    // Predicated region
    $region2: #{net_forward.1} parent=1 // pred_check
      _
    $region3: #{net_forward.1} parent=1 // pred_check_branch
      %13 = sbr.rel (0) target = $region5
    $region4: #{net_forward.1} parent=1 // pred_region
      _
    $region5: #{net_forward.1} parent=1 // pred_fallthru
      _
    // Predicated region
    $region6: #{net_forward.1} parent=1 // pred_check
      _
    $region7: #{net_forward.1} parent=1 // pred_check_branch
      %15 = sbr.rel (0) target = $region9
    $region8: #{net_forward.1} parent=1 // pred_region
      _
    $region9: #{net_forward.1} parent=1 // pred_fallthru
      _
    // Predicated region
    $region10: #{net_forward.1} parent=1 // pred_check
      _
    $region11: #{net_forward.1} parent=1 // pred_check_branch
      %17 = sbr.rel (0) target = $region13
    $region12: #{net_forward.1} parent=1 // pred_region
      _
    $region13: #{net_forward.1} parent=1 // pred_fallthru
      _
    // Predicated region
    $region14: #{net_forward.1} parent=1 // pred_check
      _
    $region15: #{net_forward.1} parent=1 // pred_check_branch
      %19 = sbr.rel (0) target = $region17
    $region16: #{net_forward.1} parent=1 // pred_region
      %21 = vsyncadd [#allocation3], 0
      %s22 = sshll.u32 %s3, 4
      %s23 = int_to_ptr.hbm [resolvable:$true] %s22
      %s24 = sshll.u32 [#allocation2], 4
      %s25 = int_to_ptr.vmem [resolvable:$true] %s24
      %30 = dma.hbm_to_vmem [thread:$0]  %s23, 1024, %s25, [#allocation3], 64, 64, 4
    $region17: #{net_forward.1} parent=1 // pred_fallthru
      _
    // Predicated region
    $region18: #{net_forward.1} parent=1 // pred_check
      _
    $region19: #{net_forward.1} parent=1 // pred_check_branch
      %32 = sbr.rel (0) target = $region21
    $region20: #{net_forward.1} parent=1 // pred_region
      %34 = vsyncadd [#allocation5], 0
      %s35 = sshll.u32 %s4, 4
      %s36 = int_to_ptr.hbm [resolvable:$true] %s35
      %s37 = sshll.u32 [#allocation4], 4
      %s38 = int_to_ptr.vmem [resolvable:$true] %s37
      %43 = dma.hbm_to_vmem [thread:$0]  %s36, 1024, %s38, [#allocation5], 64, 64, 4
    $region21: #{net_forward.1} parent=1 // pred_fallthru
      _
    // Predicated region
    $region22: #{net_forward.1} parent=1 // pred_check
      _
    $region23: #{net_forward.1} parent=1 // pred_check_branch
      %45 = sbr.rel (0) target = $region25
    $region24: #{net_forward.1} parent=1 // pred_region
      %47 = dma.done [#allocation3], 1024
    $region25: #{net_forward.1} parent=1 // pred_fallthru
      _
    // Predicated region
    $region26: #{net_forward.1} parent=1 // pred_check
      _
    $region27: #{net_forward.1} parent=1 // pred_check_branch
      %49 = sbr.rel (0) target = $region29
    $region28: #{net_forward.1} parent=1 // pred_region
      %51 = dma.done [#allocation5], 1024
    $region29: #{net_forward.1} parent=1 // pred_fallthru
      _
    %v52 = vld [vmem:[%s0] sm:$0xff]
    %v53 = vld [vmem:[%s0 + $0x8] sm:$0xff]
    %v54 = vld [vmem:[%s0 + $0x10] sm:$0xff]
    %v55 = vld [vmem:[%s0 + $0x18] sm:$0xff]
    %v56 = vld [vmem:[%s0 + $0x20] sm:$0xff]
    %v57 = vld [vmem:[%s1] sm:$0x1]
    %59 = vset.pattern.permute.xlu0 0
    %60 = vperm.xlu0 %59, %v52
    %v61 = vpop.permute.xlu0 %60
    %64 = vset.pattern.permute.xlu0 0
    %65 = vperm.xlu0 %64, %v53
    %v66 = vpop.permute.xlu0 %65
    %69 = vset.pattern.permute.xlu0 0
    %70 = vperm.xlu0 %69, %v54
    %v71 = vpop.permute.xlu0 %70
    %74 = vset.pattern.permute.xlu0 0
    %75 = vperm.xlu0 %74, %v55
    %v76 = vpop.permute.xlu0 %75
    %79 = vset.pattern.permute.xlu0 0
    %80 = vperm.xlu0 %79, %v56
    %v81 = vpop.permute.xlu0 %80
    %v83 = vperm.slane %v57, 0
    %v84 = vmul.f32 %v61, %v83
    %v85 = vmul.f32 %v66, %v83
    %v86 = vmul.f32 %v71, %v83
    %v87 = vmul.f32 %v76, %v83
    %v88 = vmul.f32 %v81, %v83
    %v89 = vld [vmem:[%s1 + $0x1] sm:$0x1]
    %90 = vset.pattern.permute.xlu0 1
    %91 = vperm.xlu0 %90, %v52
    %v92 = vpop.permute.xlu0 %91
    %94 = vset.pattern.permute.xlu0 1
    %95 = vperm.xlu0 %94, %v53
    %v96 = vpop.permute.xlu0 %95
    %98 = vset.pattern.permute.xlu0 1
    %99 = vperm.xlu0 %98, %v54
    %v100 = vpop.permute.xlu0 %99
    %102 = vset.pattern.permute.xlu0 1
    %103 = vperm.xlu0 %102, %v55
    %v104 = vpop.permute.xlu0 %103
    %106 = vset.pattern.permute.xlu0 1
    %107 = vperm.xlu0 %106, %v56
    %v108 = vpop.permute.xlu0 %107
    %v110 = vperm.slane %v89, 0
    %v111 = vmul.f32 %v92, %v110
    %v112 = vmul.f32 %v96, %v110
    %v113 = vmul.f32 %v100, %v110
    %v114 = vmul.f32 %v104, %v110
    %v115 = vmul.f32 %v108, %v110
    %v116 = vadd.f32 %v84, %v111
    %v117 = vadd.f32 %v85, %v112
    %v118 = vadd.f32 %v86, %v113
    %v119 = vadd.f32 %v87, %v114
    %v120 = vadd.f32 %v88, %v115
    %v121 = vld [vmem:[%s2] sm:$0x1]
    %v123 = vperm.slane %v121, 0
    %v125 = vadd.f32 %v116, %v123
    %v126 = vadd.f32 %v117, %v123
    %v127 = vadd.f32 %v118, %v123
    %v128 = vadd.f32 %v119, %v123
    %v129 = vadd.f32 %v120, %v123
    %v130 = vmax.f32 %v125, 0.0
    %v131 = vmax.f32 %v126, 0.0
    %v132 = vmax.f32 %v127, 0.0
    %v133 = vmax.f32 %v128, 0.0
    %v134 = vmax.f32 %v129, 0.0
    %v135 = vpack.c.bf16 %v131, %v130
    %v136 = vpack.c.bf16 %v133, %v132
    %v137 = vpack.c.bf16 %v134, %v134
    %v138 = vld [vmem:[#allocation2] sm:$0xf]
    %v139 = vld [vmem:[#allocation2 + $0x4] sm:$0xf]
    %v140 = vld [vmem:[#allocation2 + $0x8] sm:$0xf]
    %v141 = vld [vmem:[#allocation2 + $0xc] sm:$0xf]
    %v142 = vld [vmem:[#allocation2 + $0x10] sm:$0xf]
    %v143 = vld [vmem:[#allocation2 + $0x14] sm:$0xf]
    %v144 = vld [vmem:[#allocation2 + $0x18] sm:$0xf]
    %v145 = vld [vmem:[#allocation2 + $0x1c] sm:$0xf]
    %v146 = vld [vmem:[#allocation2 + $0x20] sm:$0xf]
    %v147 = vld [vmem:[#allocation2 + $0x24] sm:$0xf]
    %v148 = vld [vmem:[#allocation2 + $0x28] sm:$0xf]
    %v149 = vld [vmem:[#allocation2 + $0x2c] sm:$0xf]
    %v150 = vld [vmem:[#allocation2 + $0x30] sm:$0xf]
    %v151 = vld [vmem:[#allocation2 + $0x34] sm:$0xf]
    %v152 = vld [vmem:[#allocation2 + $0x38] sm:$0xf]
    %v153 = vld [vmem:[#allocation2 + $0x3c] sm:$0xf]
    %v170 = vunpack.c.l.b16 %v138
    %v171 = vunpack.c.l.b16 %v139
    %v172 = vunpack.c.l.b16 %v140
    %v173 = vunpack.c.l.b16 %v141
    %v174 = vunpack.c.l.b16 %v142
    %v175 = vunpack.c.l.b16 %v143
    %v176 = vunpack.c.l.b16 %v144
    %v177 = vunpack.c.l.b16 %v145
    %v178 = vunpack.c.l.b16 %v146
    %v179 = vunpack.c.l.b16 %v147
    %v180 = vunpack.c.l.b16 %v148
    %v181 = vunpack.c.l.b16 %v149
    %v182 = vunpack.c.l.b16 %v150
    %v183 = vunpack.c.l.b16 %v151
    %v184 = vunpack.c.l.b16 %v152
    %v185 = vunpack.c.l.b16 %v153
    %v186 = vpack.c.b16 %v171, %v170
    %v187 = vpack.c.b16 %v173, %v172
    %v188 = vpack.c.b16 %v175, %v174
    %v189 = vpack.c.b16 %v177, %v176
    %v190 = vpack.c.b16 %v179, %v178
    %v191 = vpack.c.b16 %v181, %v180
    %v192 = vpack.c.b16 %v183, %v182
    %v193 = vpack.c.b16 %v185, %v184
    %202 = vmatpush.bf16.msra.mxu0 %v193
    %203 = vmatpush.bf16.msra.mxu0 %v192
    %204 = vmatpush.bf16.msra.mxu0 %v191
    %205 = vmatpush.bf16.msra.mxu0 %v190
    %206 = vmatpush.bf16.msra.mxu0 %v189
    %207 = vmatpush.bf16.msra.mxu0 %v188
    %208 = vmatpush.bf16.msra.mxu0 %v187
    %209 = vmatpush.bf16.msra.mxu0 %v186
    %210 = vmatmul.bf16.gmra.mxu0 %v135
    %v211 = vpop.f32.mrf.mxu0
    %v212 = vadd.f32 0.0, %v211
    %v213 = vpop.f32.mrf.mxu0
    %v214 = vadd.f32 0.0, %v213
    %215 = vmatmul.bf16.gmra.mxu0 %v136
    %v216 = vpop.f32.mrf.mxu0
    %v217 = vadd.f32 0.0, %v216
    %v218 = vpop.f32.mrf.mxu0
    %v219 = vadd.f32 0.0, %v218
    %220 = vmatmul.bf16.gmra.mxu0 %v137
    %v221 = vpop.f32.mrf.mxu0
    %v222 = vadd.f32 0.0, %v221
    %v223 = vpop.f32.mrf.mxu0
    %224 = vdwg.mxu0
    %v225 = vmax.f32 %v212, 0.0
    %v226 = vmax.f32 %v214, 0.0
    %v227 = vmax.f32 %v217, 0.0
    %v228 = vmax.f32 %v219, 0.0
    %v229 = vmax.f32 %v222, 0.0
    %v230 = vpack.c.bf16 %v226, %v225
    %v231 = vpack.c.bf16 %v228, %v227
    %v232 = vpack.c.bf16 %v229, %v229
    %v233 = vld [vmem:[#allocation4] sm:$0xf]
    %v234 = vld [vmem:[#allocation4 + $0x4] sm:$0xf]
    %v235 = vld [vmem:[#allocation4 + $0x8] sm:$0xf]
    %v236 = vld [vmem:[#allocation4 + $0xc] sm:$0xf]
    %v237 = vld [vmem:[#allocation4 + $0x10] sm:$0xf]
    %v238 = vld [vmem:[#allocation4 + $0x14] sm:$0xf]
    %v239 = vld [vmem:[#allocation4 + $0x18] sm:$0xf]
    %v240 = vld [vmem:[#allocation4 + $0x1c] sm:$0xf]
    %v241 = vld [vmem:[#allocation4 + $0x20] sm:$0xf]
    %v242 = vld [vmem:[#allocation4 + $0x24] sm:$0xf]
    %v243 = vld [vmem:[#allocation4 + $0x28] sm:$0xf]
    %v244 = vld [vmem:[#allocation4 + $0x2c] sm:$0xf]
    %v245 = vld [vmem:[#allocation4 + $0x30] sm:$0xf]
    %v246 = vld [vmem:[#allocation4 + $0x34] sm:$0xf]
    %v247 = vld [vmem:[#allocation4 + $0x38] sm:$0xf]
    %v248 = vld [vmem:[#allocation4 + $0x3c] sm:$0xf]
    %v265 = vunpack.c.l.b16 %v233
    %v266 = vunpack.c.l.b16 %v234
    %v267 = vunpack.c.l.b16 %v235
    %v268 = vunpack.c.l.b16 %v236
    %v269 = vunpack.c.l.b16 %v237
    %v270 = vunpack.c.l.b16 %v238
    %v271 = vunpack.c.l.b16 %v239
    %v272 = vunpack.c.l.b16 %v240
    %v273 = vunpack.c.l.b16 %v241
    %v274 = vunpack.c.l.b16 %v242
    %v275 = vunpack.c.l.b16 %v243
    %v276 = vunpack.c.l.b16 %v244
    %v277 = vunpack.c.l.b16 %v245
    %v278 = vunpack.c.l.b16 %v246
    %v279 = vunpack.c.l.b16 %v247
    %v280 = vunpack.c.l.b16 %v248
    %v281 = vpack.c.b16 %v266, %v265
    %v282 = vpack.c.b16 %v268, %v267
    %v283 = vpack.c.b16 %v270, %v269
    %v284 = vpack.c.b16 %v272, %v271
    %v285 = vpack.c.b16 %v274, %v273
    %v286 = vpack.c.b16 %v276, %v275
    %v287 = vpack.c.b16 %v278, %v277
    %v288 = vpack.c.b16 %v280, %v279
    %297 = vmatpush.bf16.msra.mxu0 %v288
    %298 = vmatpush.bf16.msra.mxu0 %v287
    %299 = vmatpush.bf16.msra.mxu0 %v286
    %300 = vmatpush.bf16.msra.mxu0 %v285
    %301 = vmatpush.bf16.msra.mxu0 %v284
    %302 = vmatpush.bf16.msra.mxu0 %v283
    %303 = vmatpush.bf16.msra.mxu0 %v282
    %304 = vmatpush.bf16.msra.mxu0 %v281
    %305 = vmatmul.bf16.gmra.mxu0 %v230
    %v306 = vpop.f32.mrf.mxu0
    %v307 = vadd.f32 0.0, %v306
    %v308 = vpop.f32.mrf.mxu0
    %v309 = vadd.f32 0.0, %v308
    %310 = vmatmul.bf16.gmra.mxu0 %v231
    %v311 = vpop.f32.mrf.mxu0
    %v312 = vadd.f32 0.0, %v311
    %v313 = vpop.f32.mrf.mxu0
    %v314 = vadd.f32 0.0, %v313
    %315 = vmatmul.bf16.gmra.mxu0 %v232
    %v316 = vpop.f32.mrf.mxu0
    %v317 = vadd.f32 0.0, %v316
    %v318 = vpop.f32.mrf.mxu0
    %319 = vdwg.mxu0
    %vm320 = vcmask 39936
    %321 = vst.msk [vmem:[%s5] sm:$0xff] %vm320, %v307
    %322 = vst.msk [vmem:[%s5 + $0x8] sm:$0xff] %vm320, %v309
    %323 = vst.msk [vmem:[%s5 + $0x10] sm:$0xff] %vm320, %v312
    %324 = vst.msk [vmem:[%s5 + $0x18] sm:$0xff] %vm320, %v314
    %325 = vst.msk [vmem:[%s5 + $0x20] sm:$0xff] %vm320, %v317
    // Predicated region
    $region30: #{net_forward.1} parent=1 // pred_check
      _
    $region31: #{net_forward.1} parent=1 // pred_check_branch
      %327 = sbr.rel (0) target = $region33
    $region32: #{net_forward.1} parent=1 // pred_region
      _
    $region33: #{net_forward.1} parent=1 // pred_fallthru
      _
    // Predicated region
    $region34: #{net_forward.1} parent=1 // pred_check
      _
    $region35: #{net_forward.1} parent=1 // pred_check_branch
      %329 = sbr.rel (0) target = $region37
    $region36: #{net_forward.1} parent=1 // pred_region
      _
    $region37: #{net_forward.1} parent=1 // pred_fallthru
      _
    %330 = vsyncpa [#allocation3], 1
    %331 = vsyncpa [#allocation5], 1

</llo_original>
